<compile_context>
chip_gen: v7x
topology: tpu7x:2x2x1
jax: 0.10.0
libtpu: 0.0.40
codegen_flags: <defaults>
</compile_context>

<pallas_src>
import functools

import jax
import jax.numpy as jnp
from jax import lax
from jax.experimental import pallas as pl
from jax.experimental.pallas import tpu as pltpu


def _round_up(x, m):
    return ((x + m - 1) // m) * m


def _sublane_multiple(dtype):
    # second-to-last block dim requirement: 8 (32-bit), 16 (16-bit), 32 (8-bit)
    itemsize = jnp.dtype(dtype).itemsize
    return max(8, 32 // itemsize)


def _bce_row_mean_kernel(x_ref, y_ref, m_ref, o_ref, acc_ref, *,
                         inv_len, seq_len, tile_l, needs_tail_mask):
    k = pl.program_id(1)

    @pl.when(k == 0)
    def _():
        acc_ref[...] = jnp.zeros_like(acc_ref)

    x = x_ref[...].astype(jnp.float32)
    y = y_ref[...].astype(jnp.float32)
    w = m_ref[...].astype(jnp.float32)

    # Numerically-stable BCE-with-logits (PyTorch formulation), weighted by mask.
    loss = w * (jnp.maximum(x, 0.0) - x * y + jnp.log1p(jnp.exp(-jnp.abs(x))))

    if needs_tail_mask:
        # Ragged L-tail: boundary-block VMEM contents are undefined, so SELECT
        # them away (NaN/Inf in the dead region cannot propagate through where).
        col = k * tile_l + lax.broadcasted_iota(jnp.int32, loss.shape, 1)
        loss = jnp.where(col < seq_len, loss, 0.0)

    # Lane-dense partial sums: pure VALU adds over 128-wide lane groups.
    tb = loss.shape[0]
    acc_ref[...] += jnp.sum(loss.reshape(tb, tile_l // 128, 128), axis=1)

    @pl.when(k == pl.num_programs(1) - 1)
    def _():
        # Single cross-lane reduce + scale by 1/original_len at finalize only.
        row_sum = jnp.sum(acc_ref[...], axis=1, keepdims=True)
        o_ref[...] = (row_sum * inv_len).astype(o_ref.dtype)


def sigmoid_bce_loss(inputs, targets, mask, *, block_b=256, block_l=4096):
    """inputs, targets, mask: (B, L) (any float/int/bool dtypes). Returns (B,) f32."""
    B, L = inputs.shape
    row_align = max(_sublane_multiple(a.dtype) for a in (inputs, targets, mask))

    # Batch tile: <= block_b; for small B try to split ~4 ways (megacore),
    # falling back to the full batch when alignment would exceed B.
    if B <= block_b:
        tb = _round_up(pl.cdiv(B, 4), row_align)
        TB = tb if tb < B else B
    else:
        TB = _round_up(block_b, row_align)

    # L tile: multiple of 128 so the (TB, TL//128, 128) lane-group reshape is exact.
    TL = _round_up(min(block_l, L), 128)

    grid = (pl.cdiv(B, TB), pl.cdiv(L, TL))
    needs_tail_mask = (L % TL) != 0

    kernel = functools.partial(
        _bce_row_mean_kernel,
        inv_len=1.0 / float(L),
        seq_len=L,
        tile_l=TL,
        needs_tail_mask=needs_tail_mask,
    )

    # VMEM budget: 3 double-buffered input tiles + accumulator + headroom,
    # capped at 48 MiB so it is safe on v7x (64 MiB physical per TC).
    itemsizes = sum(jnp.dtype(a.dtype).itemsize for a in (inputs, targets, mask))
    vmem_need = 2 * TB * TL * itemsizes + TB * 128 * 4 + 2 * TB * 4
    vmem_limit = int(min(max(2 * vmem_need, 16 << 20), 48 << 20))

    in_bytes = sum(a.size * jnp.dtype(a.dtype).itemsize
                   for a in (inputs, targets, mask))

    out = pl.pallas_call(
        kernel,
        out_shape=jax.ShapeDtypeStruct((B, 1), jnp.float32),
        grid_spec=pltpu.PrefetchScalarGridSpec(
            num_scalar_prefetch=0,
            grid=grid,                              # reduction (L) axis last
            in_specs=[
                pl.BlockSpec((TB, TL), lambda i, k: (i, k)),
                pl.BlockSpec((TB, TL), lambda i, k: (i, k)),
                pl.BlockSpec((TB, TL), lambda i, k: (i, k)),
            ],
            out_specs=pl.BlockSpec((TB, 1), lambda i, k: (i, 0)),
            scratch_shapes=[pltpu.VMEM((TB, 128), jnp.float32)],
        ),
        compiler_params=pltpu.CompilerParams(
            dimension_semantics=("parallel", "arbitrary"),
            vmem_limit_bytes=vmem_limit,
        ),
        cost_estimate=pl.CostEstimate(
            flops=8 * B * L,
            transcendentals=2 * B * L,
            bytes_accessed=in_bytes + B * 4,
        ),
    )(inputs, targets, mask)
    return out[:, 0]


def _reference(inputs, targets, mask):
    x = inputs.astype(jnp.float32)
    y = targets.astype(jnp.float32)
    m = mask.astype(jnp.float32)
    loss = m * (jnp.maximum(x, 0.0) - x * y + jnp.log1p(jnp.exp(-jnp.abs(x))))
    return loss.mean(axis=1)


if __name__ == "__main__":
    key = jax.random.PRNGKey(0)

    # ---- case 1: small aligned f32 shapes (batch_size=8, len=128) ----
    k1, k2, k3, key = jax.random.split(key, 4)
    B, L = 8, 128
    x = jax.random.normal(k1, (B, L), dtype=jnp.float32) * 2.0
    y = (jax.random.uniform(k2, (B, L)) > 0.5).astype(jnp.float32)
    m = (jax.random.uniform(k3, (B, L)) > 0.25).astype(jnp.float32)
    out = sigmoid_bce_loss(x, y, m)
    jax.block_until_ready(out)
    ref = _reference(x, y, m)
    assert out.shape == (B,)
    assert jnp.allclose(out, ref, atol=1e-5, rtol=1e-5), (out, ref)

    # ---- case 2: unaligned shapes (exercise the in-kernel ragged-tail mask) ----
    k1, k2, k3, key = jax.random.split(key, 4)
    B2, L2 = 5, 200
    x2 = jax.random.normal(k1, (B2, L2), dtype=jnp.float32) * 3.0
    y2 = (jax.random.uniform(k2, (B2, L2)) > 0.5).astype(jnp.float32)
    m2 = (jax.random.uniform(k3, (B2, L2)) > 0.25).astype(jnp.float32)
    out2 = sigmoid_bce_loss(x2, y2, m2)
    jax.block_until_ready(out2)
    ref2 = _reference(x2, y2, m2)
    assert out2.shape == (B2,)
    assert jnp.allclose(out2, ref2, atol=1e-5, rtol=1e-5), (out2, ref2)

    # ---- case 3: reduced-precision HBM storage (bf16 logits/targets, int8 mask) ----
    k1, k2, k3, key = jax.random.split(key, 4)
    B3, L3 = 16, 256
    x3 = (jax.random.normal(k1, (B3, L3), dtype=jnp.float32) * 2.0).astype(jnp.bfloat16)
    y3 = (jax.random.uniform(k2, (B3, L3)) > 0.5).astype(jnp.bfloat16)
    m3 = (jax.random.uniform(k3, (B3, L3)) > 0.25).astype(jnp.int8)
    out3 = sigmoid_bce_loss(x3, y3, m3)
    jax.block_until_ready(out3)
    ref3 = _reference(x3, y3, m3)
    assert out3.shape == (B3,)
    assert jnp.allclose(out3, ref3, atol=1e-4, rtol=1e-4), (out3, ref3)

    print("KERNEL_OK")
</pallas_src>

<mosaic_0001>
module attributes {stable_mosaic.version = 11 : i64} {
  func.func @_bce_row_mean_kernel(%arg0: i32, %arg1: i32, %arg2: memref<8x128xf32, #tpu.memory_space<vmem>>, %arg3: memref<8x128xf32, #tpu.memory_space<vmem>>, %arg4: memref<8x128xf32, #tpu.memory_space<vmem>>, %arg5: memref<8x1xf32, #tpu.memory_space<vmem>>, %arg6: memref<8x128xf32, #tpu.memory_space<vmem>>) attributes {dimension_semantics = [#tpu.dimension_semantics<parallel>, #tpu.dimension_semantics<arbitrary>], iteration_bounds = array<i64: 1, 1>, scalar_prefetch = 0 : i64, scratch_operands = 1 : i64, tpu.core_type = #tpu.core_type<tc>, window_params = [{transform_indices = @transform_0, window_bounds = array<i64: 8, 128>}, {transform_indices = @transform_1, window_bounds = array<i64: 8, 128>}, {transform_indices = @transform_2, window_bounds = array<i64: 8, 128>}, {transform_indices = @transform_3, window_bounds = array<i64: 8, 1>}]} {
    %c0_i32 = arith.constant 0 : i32
    %0 = arith.cmpi eq, %arg1, %c0_i32 : i32
    %1 = arith.extui %0 : i1 to i32
    %c0_i32_0 = arith.constant 0 : i32
    %2 = arith.cmpi ne, %1, %c0_i32_0 : i32
    scf.if %2 {
      %cst_14 = arith.constant 0.000000e+00 : f32
      %25 = vector.broadcast %cst_14 : f32 to vector<8x128xf32>
      %c0_15 = arith.constant 0 : index
      %c0_16 = arith.constant 0 : index
      %26 = vector.load %arg6[%c0_15, %c0_16] : memref<8x128xf32, #tpu.memory_space<vmem>>, vector<8x128xf32>
      tpu.vector_store %arg6[%c0_15, %c0_16], %25 {strides = array<i32>} : memref<8x128xf32, #tpu.memory_space<vmem>>, vector<8x128xf32>,
    } else {
    }
    %c0 = arith.constant 0 : index
    %c0_1 = arith.constant 0 : index
    %3 = vector.load %arg2[%c0, %c0_1] : memref<8x128xf32, #tpu.memory_space<vmem>>, vector<8x128xf32>
    %c0_2 = arith.constant 0 : index
    %c0_3 = arith.constant 0 : index
    %4 = vector.load %arg3[%c0_2, %c0_3] : memref<8x128xf32, #tpu.memory_space<vmem>>, vector<8x128xf32>
    %c0_4 = arith.constant 0 : index
    %c0_5 = arith.constant 0 : index
    %5 = vector.load %arg4[%c0_4, %c0_5] : memref<8x128xf32, #tpu.memory_space<vmem>>, vector<8x128xf32>
    %cst = arith.constant 0.000000e+00 : f32
    %6 = vector.broadcast %cst : f32 to vector<8x128xf32>
    %7 = arith.maximumf %3, %6 : vector<8x128xf32>
    %8 = arith.mulf %3, %4 : vector<8x128xf32>
    %9 = arith.subf %7, %8 : vector<8x128xf32>
    %10 = math.absf %3 : vector<8x128xf32>
    %cst_6 = arith.constant 0.000000e+00 : f32
    %11 = vector.broadcast %cst_6 : f32 to vector<8x128xf32>
    %12 = arith.subf %11, %10 : vector<8x128xf32>
    %13 = math.exp %12 : vector<8x128xf32>
    %14 = math.log1p %13 : vector<8x128xf32>
    %15 = arith.addf %9, %14 : vector<8x128xf32>
    %16 = arith.mulf %5, %15 : vector<8x128xf32>
    %c0_7 = arith.constant 0 : index
    %c0_8 = arith.constant 0 : index
    %17 = vector.load %arg6[%c0_7, %c0_8] : memref<8x128xf32, #tpu.memory_space<vmem>>, vector<8x128xf32>
    %18 = vector.shape_cast %16 : vector<8x128xf32> to vector<8x1x128xf32>
    %cst_9 = arith.constant dense<0.000000e+00> : vector<8x128xf32>
    %19 = vector.multi_reduction <add>, %18, %cst_9 [1] : vector<8x1x128xf32> to vector<8x128xf32>
    %20 = arith.addf %17, %19 : vector<8x128xf32>
    %c0_10 = arith.constant 0 : index
    %c0_11 = arith.constant 0 : index
    %21 = vector.load %arg6[%c0_10, %c0_11] : memref<8x128xf32, #tpu.memory_space<vmem>>, vector<8x128xf32>
    tpu.vector_store %arg6[%c0_10, %c0_11], %20 {strides = array<i32>} : memref<8x128xf32, #tpu.memory_space<vmem>>, vector<8x128xf32>,
    %c0_i32_12 = arith.constant 0 : i32
    %22 = arith.cmpi eq, %arg1, %c0_i32_12 : i32
    %23 = arith.extui %22 : i1 to i32
    %c0_i32_13 = arith.constant 0 : i32
    %24 = arith.cmpi ne, %23, %c0_i32_13 : i32
    scf.if %24 {
      %c0_14 = arith.constant 0 : index
      %c0_15 = arith.constant 0 : index
      %25 = vector.load %arg6[%c0_14, %c0_15] : memref<8x128xf32, #tpu.memory_space<vmem>>, vector<8x128xf32>
      %cst_16 = arith.constant dense<0.000000e+00> : vector<8xf32>
      %26 = vector.multi_reduction <add>, %25, %cst_16 [1] : vector<8x128xf32> to vector<8xf32>
      %27 = vector.shape_cast %26 : vector<8xf32> to vector<8x1xf32>
      %cst_17 = arith.constant 7.812500e-03 : f32
      %28 = vector.broadcast %cst_17 : f32 to vector<8x1xf32>
      %29 = arith.mulf %27, %28 : vector<8x1xf32>
      %c0_18 = arith.constant 0 : index
      %c0_19 = arith.constant 0 : index
      %30 = vector.load %arg5[%c0_18, %c0_19] : memref<8x1xf32, #tpu.memory_space<vmem>>, vector<8x1xf32>
      tpu.vector_store %arg5[%c0_18, %c0_19], %29 {strides = array<i32>} : memref<8x1xf32, #tpu.memory_space<vmem>>, vector<8x1xf32>,
    } else {
    }
    return
  }
  func.func @transform_0(%arg0: i32, %arg1: i32) -> (i32, i32) {
    %c0_i32 = arith.constant 0 : i32
    return %arg0, %arg1 : i32, i32
  }
  func.func @transform_1(%arg0: i32, %arg1: i32) -> (i32, i32) {
    %c0_i32 = arith.constant 0 : i32
    return %arg0, %arg1 : i32, i32
  }
  func.func @transform_2(%arg0: i32, %arg1: i32) -> (i32, i32) {
    %c0_i32 = arith.constant 0 : i32
    return %arg0, %arg1 : i32, i32
  }
  func.func @transform_3(%arg0: i32, %arg1: i32) -> (i32, i32) {
    %c0_i32 = arith.constant 0 : i32
    %c0_i32_0 = arith.constant 0 : i32
    return %arg0, %c0_i32 : i32, i32
  }
}

</mosaic_0001>

<llo_original>
// kernel: tpu_custom_call.1
$region0: #{tpu_custom_call.1}
  #allocation0 [shape = 'u32[]', space=smem, size = 0x4, offset = 0x4, fixed_abs, tag = 'smem constant byte address 0x4 - core index']
  #allocation1 [shape = 'u32[144,128]{1,0:T(1,128)}', space=vmem, size = 0x12000, scoped, tag = 'internal scratch']
  #allocation2 [shape = 'f32[8,128]{1,0:T(8,128)}', space=vmem, size = 0x1000, scoped, tag = 'scratch operand']
  %s0 = inlined_call_operand.hbm [shape: f32[8,128], index: 0, kind: input, shape index: {}]
  %s1 = inlined_call_operand.hbm [shape: f32[8,128], index: 1, kind: input, shape index: {}]
  %s2 = inlined_call_operand.hbm [shape: f32[8,128], index: 2, kind: input, shape index: {}]
  %s3 = inlined_call_operand.vmem [shape: f32[8,1], index: 3, kind: output, shape index: {}]
  %s4 = sld [smem:[#allocation0]]
  $region42: #{tpu_custom_call.1} parent=0
    _
  %s6 = ssub.s32 1, %s4
  %s7 = scalar_select 0, %s6, %s4
  $region1: #{tpu_custom_call.1} parent=0
    #allocation3 [shape = 'u8[4096]{0}', space=vmem, size = 0x1000, scoped, tag = 'input window, operand 0, single buffered']
    #allocation4 [shape = 's32[1]{0}', space=sflag, size = 0x4, scoped, tag = 'scoped memory for tpu_custom_call.1']
    #allocation5 [shape = 'u8[4096]{0}', space=vmem, size = 0x1000, scoped, tag = 'input window, operand 1, single buffered']
    #allocation6 [shape = 's32[1]{0}', space=sflag, size = 0x4, scoped, tag = 'scoped memory for tpu_custom_call.1']
    #allocation7 [shape = 'u8[4096]{0}', space=vmem, size = 0x1000, scoped, tag = 'input window, operand 2, single buffered']
    %8 = vsyncpa [#allocation4], 0
    %9 = vsyncpa [#allocation6], 0
    // Predicated region
    $region2: #{tpu_custom_call.1} parent=1 // pred_check
      _
    $region3: #{tpu_custom_call.1} parent=1 // pred_check_branch
      %11 = sbr.rel (0) target = $region5
    $region4: #{tpu_custom_call.1} parent=1 // pred_region
      %s13 = ssub.s32 128, 128
      %14 = vsyncadd [#allocation4], %s13
      %s16 = sshll.u32 [#allocation3], 4
      %s17 = int_to_ptr.vmem [resolvable:$true] %s16
      %19 = dma.hbm_to_vmem [thread:$0]  %s0, 128, %s17, [#allocation4]
    $region5: #{tpu_custom_call.1} parent=1 // pred_fallthru
      _
    // Predicated region
    $region6: #{tpu_custom_call.1} parent=1 // pred_check
      _
    $region7: #{tpu_custom_call.1} parent=1 // pred_check_branch
      %21 = sbr.rel (0) target = $region9
    $region8: #{tpu_custom_call.1} parent=1 // pred_region
      %s23 = ssub.s32 128, 128
      %24 = vsyncadd [#allocation6], %s23
      %s26 = sshll.u32 [#allocation5], 4
      %s27 = int_to_ptr.vmem [resolvable:$true] %s26
      %29 = dma.hbm_to_vmem [thread:$0]  %s1, 128, %s27, [#allocation6]
    $region9: #{tpu_custom_call.1} parent=1 // pred_fallthru
      _
    // Predicated region
    $region10: #{tpu_custom_call.1} parent=1 // pred_check
      _
    $region11: #{tpu_custom_call.1} parent=1 // pred_check_branch
      %31 = sbr.rel (0) target = $region13
    $region12: #{tpu_custom_call.1} parent=1 // pred_region
      %s33 = ssub.s32 128, 128
      %34 = vsyncadd [#allocation6], %s33
      %s36 = sshll.u32 [#allocation7], 4
      %s37 = int_to_ptr.vmem [resolvable:$true] %s36
      %39 = dma.hbm_to_vmem [thread:$0]  %s2, 128, %s37, [#allocation6]
    $region13: #{tpu_custom_call.1} parent=1 // pred_fallthru
      _
    // Predicated region
    $region14: #{tpu_custom_call.1} parent=1 // pred_check
      _
    $region15: #{tpu_custom_call.1} parent=1 // pred_check_branch
      %41 = sbr.rel (0) target = $region17
    $region16: #{tpu_custom_call.1} parent=1 // pred_region
      %42 = dma.done [#allocation4], 128
    $region17: #{tpu_custom_call.1} parent=1 // pred_fallthru
      _
    // Predicated region
    $region18: #{tpu_custom_call.1} parent=1 // pred_check
      _
    $region19: #{tpu_custom_call.1} parent=1 // pred_check_branch
      %44 = sbr.rel (0) target = $region21
    $region20: #{tpu_custom_call.1} parent=1 // pred_region
      %45 = dma.done [#allocation6], 128
    $region21: #{tpu_custom_call.1} parent=1 // pred_fallthru
      _
    // Predicated region
    $region22: #{tpu_custom_call.1} parent=1 // pred_check
      _
    $region23: #{tpu_custom_call.1} parent=1 // pred_check_branch
      %47 = sbr.rel (0) target = $region25
    $region24: #{tpu_custom_call.1} parent=1 // pred_region
      %48 = dma.done [#allocation6], 128
    $region25: #{tpu_custom_call.1} parent=1 // pred_fallthru
      _
    %p49 = scmp.eq.s32.totalorder 0, 0
    // Predicated region
    $region26: #{tpu_custom_call.1} parent=1 // pred_check
      %p50 = pneg %p49
    $region27: #{tpu_custom_call.1} parent=1 // pred_check_branch
      %52 = sbr.rel (%p50) target = $region29
    $region28: #{tpu_custom_call.1} parent=1 // pred_region
      %53 = vst [vmem:[#allocation2] sm:$0xff] 0.0
    $region29: #{tpu_custom_call.1} parent=1 // pred_fallthru
      _
    %v54 = vld [vmem:[#allocation3] sm:$0xff]
    %v55 = vld [vmem:[#allocation5] sm:$0xff]
    %v56 = vld [vmem:[#allocation7] sm:$0xff]
    %v57 = vmax.f32 %v54, 0.0
    %v58 = vmul.f32 %v54, %v55
    %v59 = vsub.f32 %v57, %v58
    %v60 = vand.u32 2147483647, %v54
    %v61 = vsub.f32 0.0, %v60
    %v62 = vmul.f32 %v61, 1.442695
    %v63 = vpow.pop %v62
    %v64 = vadd.f32 %v63, 1.0
    %v65 = vlog2.pop %v64
    %v66 = vmul.f32 %v65, 0.6931472
    %v67 = vmul.f32 -0.5, %v63
    %v68 = vadd.f32 %v67, 1.0
    %v69 = vmul.f32 %v68, %v63
    %v70 = vand.u32 2147483647, %v63
    %vm71 = vcmp.lt.f32.partialorder %v70, 0.0004427343
    %v72 = vsel %vm71, %v69, %v66
    %v73 = vadd.f32 %v59, %v72
    %v74 = vmul.f32 %v56, %v73
    %v75 = vld [vmem:[#allocation2] sm:$0xff]
    %v76 = vadd.f32 %v74, 0.0
    %v77 = vadd.f32 %v75, %v76
    %78 = vst [vmem:[#allocation2] sm:$0xff] %v77
    // Predicated region
    $region30: #{tpu_custom_call.1} parent=1 // pred_check
      %p79 = pneg %p49
    $region31: #{tpu_custom_call.1} parent=1 // pred_check_branch
      %81 = sbr.rel (%p79) target = $region33
    $region32: #{tpu_custom_call.1} parent=1 // pred_region
      %v82 = vld [vmem:[#allocation2] sm:$0xff]
      %83 = vadd.xlane.f32.xlu0 %v82
      %v84 = vpop.xlane.xlu0 %83
      %v85 = vmul.f32 %v84, 0.0078125
      %vm86 = vcmask 7168
      %87 = vst.msk [vmem:[%s3] sm:$0xff] %vm86, %v85
    $region33: #{tpu_custom_call.1} parent=1 // pred_fallthru
      _
    // Predicated region
    $region34: #{tpu_custom_call.1} parent=1 // pred_check
      _
    $region35: #{tpu_custom_call.1} parent=1 // pred_check_branch
      %89 = sbr.rel (0) target = $region37
    $region36: #{tpu_custom_call.1} parent=1 // pred_region
      _
    $region37: #{tpu_custom_call.1} parent=1 // pred_fallthru
      _
    // Predicated region
    $region38: #{tpu_custom_call.1} parent=1 // pred_check
      _
    $region39: #{tpu_custom_call.1} parent=1 // pred_check_branch
      %91 = sbr.rel (0) target = $region41
    $region40: #{tpu_custom_call.1} parent=1 // pred_region
      _
    $region41: #{tpu_custom_call.1} parent=1 // pred_fallthru
      _
    %92 = vsyncpa [#allocation4], 1
    %93 = vsyncpa [#allocation6], 1

</llo_original>
